<compile_context>
chip_gen: v6e
topology: v6e:2x2x1
jax: 0.10.0
libtpu: 0.0.40
codegen_flags: <defaults>
</compile_context>

<pallas_src>
import functools

import jax
import jax.numpy as jnp
from jax.experimental import pallas as pl
from jax.experimental.pallas import tpu as pltpu


def _round_up(x, m):
    return ((x + m - 1) // m) * m


def _sublane_multiple(itemsize):
    # f32 -> 8, bf16 -> 16, int8/fp8 -> 32 (sub-32-bit dtypes pack along sublanes)
    return 8 * max(1, 4 // max(1, int(itemsize)))


def _pick_block(dim, pref=512):
    """Largest of {pref,512,256,128} that divides a 128-aligned dim."""
    for cand in (pref, 512, 256, 128):
        if cand <= dim and dim % cand == 0:
            return cand
    return dim


# ----------------------------------------------------------------------------
# Hardware / feature detection (cached, trace-time only)
# ----------------------------------------------------------------------------
@functools.lru_cache(maxsize=None)
def _hw_params():
    """(vmem_limit_bytes, sizer_budget_bytes, block_m_cap, num_tensorcores)."""
    cap = None
    try:
        info = pltpu.get_tpu_info()
        cap = int(getattr(info, "vmem_capacity_bytes", 0)) or None
    except Exception:
        cap = None
    if cap is None:
        cap = 128 * 1024 * 1024  # conservative default if query unavailable
    if cap <= 80 * 1024 * 1024:
        # v7x-class: 64 MiB per TensorCore, 2 TCs/chip.  Leave headroom for
        # Mosaic internal scratch / semaphores / double-buffered x,out tiles.
        limit = int(cap * 0.8)          # ~51 MiB scoped limit
        budget = int(limit * 0.6)       # ~31 MiB for the block sizer
        block_m_cap = 512
        num_tc = 2
    else:
        # v5e / v6e: 128 MiB VMEM, 1 TC/chip -> use most of it.
        limit = min(cap - 16 * 1024 * 1024, 112 * 1024 * 1024)
        budget = 80 * 1024 * 1024
        block_m_cap = 1024
        num_tc = 1
    return limit, budget, block_m_cap, num_tc


@functools.lru_cache(maxsize=None)
def _supports_single_buffer():
    """Static feature check for pipeline_mode=pl.Buffered(1) (no try around the call)."""
    if not hasattr(pl, "Buffered"):
        return False
    try:
        pl.BlockSpec((8, 128), lambda i: (0, 0), pipeline_mode=pl.Buffered(1))
        return True
    except Exception:
        return False


# ----------------------------------------------------------------------------
# Parameter preparation (hoisted out of the per-call path)
# ----------------------------------------------------------------------------
def prepare_params(w1, b1, w2, b2, *, compute_dtype=None):
    """Pad feature dims to lane-dense multiples of 128 and cast ONCE.

    w1: (2H, H) (already transposed from the nn.Linear layout), b1: (H,)
    w2: (H, H), b2: (H,)
    """
    two_h, H = w1.shape
    assert w2.shape == (H, H) and b1.shape == (H,) and b2.shape == (H,)
    cdt = jnp.dtype(compute_dtype) if compute_dtype is not None else jnp.dtype(w1.dtype)

    h_pad = _round_up(H, 128)
    two_h_pad = _round_up(two_h, 128)
    # TODO(synk): for H >= 512 on v6e/v7x, 256-aligned padding can improve
    # 2x256^2 MXU column occupancy for non-256-aligned H; kept 128 here.

    w1_p = jnp.pad(w1, ((0, two_h_pad - two_h), (0, h_pad - H))).astype(cdt)
    w2_p = jnp.pad(w2, ((0, h_pad - H), (0, h_pad - H))).astype(cdt)
    b1_p = jnp.pad(b1, (0, h_pad - H)).reshape(1, h_pad).astype(jnp.float32)
    b2_p = jnp.pad(b2, (0, h_pad - H)).reshape(1, h_pad).astype(jnp.float32)

    return dict(w1=w1_p, b1=b1_p, w2=w2_p, b2=b2_p,
                H=H, two_h=two_h, h_pad=h_pad, two_h_pad=two_h_pad,
                compute_dtype=cdt)


# ----------------------------------------------------------------------------
# Fast path: both weights resident in VMEM, fused MLP kernel
# ----------------------------------------------------------------------------
def _fused_mlp_kernel(x_ref, w1_ref, b1_ref, w2_ref, b2_ref, o_ref):
    x = x_ref[...]                                              # (bm, 2Hp)
    h = jnp.dot(x, w1_ref[...], preferred_element_type=jnp.float32)
    h = jnp.maximum(h + b1_ref[...], 0.0)                       # bias + ReLU (f32)
    y = jnp.dot(h.astype(w2_ref.dtype), w2_ref[...],
                preferred_element_type=jnp.float32)
    o_ref[...] = jnp.tanh(y + b2_ref[...]).astype(o_ref.dtype)


def _auto_block_m(batch, two_h_pad, h_pad, itemsize, weight_buf_count,
                  budget, block_m_cap, num_tc):
    """Pick a batch tile filling the VMEM budget with weights resident.

    Returns 0 if resident weights do not fit (caller uses the K-tiled path).
    """
    sub = _sublane_multiple(itemsize)
    weight_bytes = weight_buf_count * (
        (two_h_pad * h_pad + h_pad * h_pad) * itemsize + 2 * h_pad * 4)
    rem = budget - weight_bytes
    # per-row cost: x tile (2 bufs) + out tile (2 bufs, <=4B) + f32 hidden
    per_row = 2 * two_h_pad * itemsize + 2 * h_pad * 4 + h_pad * 4
    if rem < per_row * sub:
        return 0
    bm = min(block_m_cap, rem // per_row)
    bm = max(sub, (int(bm) // sub) * sub)
    bm = min(bm, _round_up(batch, sub))
    # Only v7x has 2 TensorCores per chip: keep >= 2 grid steps there so the
    # "parallel" axis can shard across cores.  Skip on v5e/v6e (1 TC).
    if num_tc >= 2 and batch >= 2 * sub and bm >= batch:
        bm = _round_up(-(-batch // 2), sub)
    return int(bm)


def _fused_forward(x_p, params, out_dtype, block_m, vmem_limit, single_buffer):
    B = x_p.shape[0]
    h_pad, two_h_pad = params["h_pad"], params["two_h_pad"]

    grid = (pl.cdiv(B, block_m),)   # partial trailing block masked by Pallas

    if single_buffer:
        def w_spec(shape):
            # Constant index_map -> resident; double-buffering only wastes VMEM.
            return pl.BlockSpec(shape, lambda i: (0, 0),
                                pipeline_mode=pl.Buffered(1))
    else:
        def w_spec(shape):
            return pl.BlockSpec(shape, lambda i: (0, 0))

    cost = pl.CostEstimate(
        flops=2 * B * (two_h_pad * h_pad + h_pad * h_pad),
        transcendentals=B * h_pad,
        bytes_accessed=(x_p.size * x_p.dtype.itemsize
                        + params["w1"].size * params["w1"].dtype.itemsize
                        + params["w2"].size * params["w2"].dtype.itemsize
                        + (params["b1"].size + params["b2"].size) * 4
                        + B * h_pad * jnp.dtype(out_dtype).itemsize),
    )

    # TODO(synk): if profiling shows the x-tile DMA exposed for small H,
    # bump in_specs[0] to pipeline_mode=pl.Buffered(3) and sweep.
    return pl.pallas_call(
        _fused_mlp_kernel,
        out_shape=jax.ShapeDtypeStruct((B, h_pad), out_dtype),
        grid_spec=pltpu.PrefetchScalarGridSpec(
            num_scalar_prefetch=0,
            grid=grid,
            in_specs=[
                pl.BlockSpec((block_m, two_h_pad), lambda i: (i, 0)),  # x tile
                w_spec((two_h_pad, h_pad)),                            # W1 (resident)
                w_spec((1, h_pad)),                                    # b1
                w_spec((h_pad, h_pad)),                                # W2 (resident)
                w_spec((1, h_pad)),                                    # b2
            ],
            out_specs=pl.BlockSpec((block_m, h_pad), lambda i: (i, 0)),
        ),
        compiler_params=pltpu.CompilerParams(
            dimension_semantics=("parallel",),
            vmem_limit_bytes=vmem_limit,
        ),
        cost_estimate=cost,
    )(x_p, params["w1"], params["b1"], params["w2"], params["b2"])


# ----------------------------------------------------------------------------
# Fallback path for large H: K-tiled matmul + epilogue (weights don't fit VMEM)
# ----------------------------------------------------------------------------
def _make_matmul_act_kernel(act):
    def kernel(x_ref, w_ref, b_ref, o_ref, acc_ref):
        @pl.when(pl.program_id(2) == 0)
        def _():
            acc_ref[...] = jnp.zeros_like(acc_ref)
        acc_ref[...] += jnp.dot(x_ref[...], w_ref[...],
                                preferred_element_type=jnp.float32)

        @pl.when(pl.program_id(2) == pl.num_programs(2) - 1)
        def _():
            o_ref[...] = act(acc_ref[...] + b_ref[...]).astype(o_ref.dtype)
    return kernel


def _tiled_matmul_act(x, w, b, act, out_dtype, *, bm, bn, bk, vmem_limit):
    M, K = x.shape
    _, N = w.shape
    assert K % bk == 0 and N % bn == 0
    grid = (pl.cdiv(M, bm), N // bn, K // bk)
    cost = pl.CostEstimate(
        flops=2 * M * K * N, transcendentals=M * N,
        bytes_accessed=(x.size * x.dtype.itemsize + w.size * w.dtype.itemsize
                        + b.size * 4 + M * N * jnp.dtype(out_dtype).itemsize))
    return pl.pallas_call(
        _make_matmul_act_kernel(act),
        out_shape=jax.ShapeDtypeStruct((M, N), out_dtype),
        grid_spec=pltpu.PrefetchScalarGridSpec(
            num_scalar_prefetch=0,
            grid=grid,
            in_specs=[pl.BlockSpec((bm, bk), lambda i, j, k: (i, k)),
                      pl.BlockSpec((bk, bn), lambda i, j, k: (k, j)),
                      pl.BlockSpec((1, bn), lambda i, j, k: (0, j))],
            out_specs=pl.BlockSpec((bm, bn), lambda i, j, k: (i, j)),
            scratch_shapes=[pltpu.VMEM((bm, bn), jnp.float32)],
        ),
        compiler_params=pltpu.CompilerParams(
            dimension_semantics=("parallel", "parallel", "arbitrary"),
            vmem_limit_bytes=vmem_limit,
        ),
        cost_estimate=cost,
    )(x, w, b)


def _large_h_forward(x_p, params, out_dtype, vmem_limit):
    cdt = params["compute_dtype"]
    h_pad, two_h_pad = params["h_pad"], params["two_h_pad"]
    B = x_p.shape[0]
    sub = _sublane_multiple(cdt.itemsize)
    bm = min(256, _round_up(B, sub))
    # Pass 1: h = ReLU(x @ W1 + b1), K tiled over 2H, N tiled over H.
    h = _tiled_matmul_act(x_p, params["w1"], params["b1"],
                          lambda v: jnp.maximum(v, 0.0), cdt,
                          bm=bm, bn=_pick_block(h_pad), bk=_pick_block(two_h_pad),
                          vmem_limit=vmem_limit)
    # Pass 2: y = Tanh(h @ W2 + b2), K and N tiled over H.
    return _tiled_matmul_act(h, params["w2"], params["b2"], jnp.tanh, out_dtype,
                             bm=bm, bn=_pick_block(h_pad), bk=_pick_block(h_pad),
                             vmem_limit=vmem_limit)


# ----------------------------------------------------------------------------
# Public forward
# ----------------------------------------------------------------------------
def transformer_forward(top2, params, *, block_m=None):
    """top2: (B, 2H). params: output of prepare_params(w1, b1, w2, b2)."""
    B, two_h = top2.shape
    assert two_h == params["two_h"]
    H, h_pad, two_h_pad = params["H"], params["h_pad"], params["two_h_pad"]
    cdt = params["compute_dtype"]

    vmem_limit, budget, bm_cap, num_tc = _hw_params()
    single_buffer = _supports_single_buffer()
    weight_buf_count = 1 if single_buffer else 2

    # Per-call activation pad/cast only (weights were prepared once).
    if two_h_pad != two_h or jnp.dtype(top2.dtype) != cdt:
        x_p = jnp.pad(top2, ((0, 0), (0, two_h_pad - two_h))).astype(cdt)
    else:
        x_p = top2

    if block_m is None:
        block_m = _auto_block_m(B, two_h_pad, h_pad, cdt.itemsize,
                                weight_buf_count, budget, bm_cap, num_tc)
    if block_m and block_m > 0:
        sub = _sublane_multiple(cdt.itemsize)
        block_m = max(sub, _round_up(int(block_m), sub))
        out = _fused_forward(x_p, params, top2.dtype, block_m,
                             vmem_limit, single_buffer)
    else:
        # Resident weights exceed the VMEM budget (hit first on v7x's 64 MiB):
        # degrade gracefully to the K-tiled two-pass path.
        out = _large_h_forward(x_p, params, top2.dtype, vmem_limit)

    return out[:B, :H]


# ----------------------------------------------------------------------------
# Reference / init / demo
# ----------------------------------------------------------------------------
def init_params(key, dim_hidden):
    """Synthetic init mirroring the PyTorch module's shapes.
    nn.Linear(2H, H): weight (H, 2H), bias (H) -> stored transposed here.
    nn.Linear(H, H):  weight (H, H),  bias (H).
    ret: Parameter(dim_hidden) ~ N(0,1) (unused in forward)."""
    k1, k2, k3, k4, k5 = jax.random.split(key, 5)
    two_h = 2 * dim_hidden
    lim1 = 1.0 / jnp.sqrt(two_h)
    lim2 = 1.0 / jnp.sqrt(dim_hidden)
    w1 = jax.random.uniform(k1, (two_h, dim_hidden), jnp.float32, -lim1, lim1)
    b1 = jax.random.uniform(k2, (dim_hidden,), jnp.float32, -lim1, lim1)
    w2 = jax.random.uniform(k3, (dim_hidden, dim_hidden), jnp.float32, -lim2, lim2)
    b2 = jax.random.uniform(k4, (dim_hidden,), jnp.float32, -lim2, lim2)
    ret = jax.random.normal(k5, (dim_hidden,), jnp.float32)  # unused in forward
    return w1, b1, w2, b2, ret


def reference_forward(top2, w1, b1, w2, b2):
    h = jnp.maximum(top2 @ w1 + b1, 0.0)
    return jnp.tanh(h @ w2 + b2)


if __name__ == "__main__":
    key = jax.random.PRNGKey(0)
    dim_hidden = 32
    batch = 8

    kp, kx = jax.random.split(key)
    w1, b1, w2, b2, ret = init_params(kp, dim_hidden)
    top2 = jax.random.normal(kx, (batch, 2 * dim_hidden), jnp.float32)

    # f32 compute keeps the 1e-5 demo tolerance; pass compute_dtype=jnp.bfloat16
    # for 2-3x matmul throughput at large H when tolerance allows.
    params = prepare_params(w1, b1, w2, b2)

    out = jax.block_until_ready(transformer_forward(top2, params))
    ref = reference_forward(top2, w1, b1, w2, b2)

    assert out.shape == (batch, dim_hidden)
    assert jnp.allclose(out, ref, atol=1e-5, rtol=1e-5), \
        float(jnp.max(jnp.abs(out - ref)))

    print("KERNEL_OK")
</pallas_src>

<mosaic_0001>
module attributes {stable_mosaic.version = 11 : i64} {
  func.func @_fused_mlp_kernel(%arg0: i32, %arg1: memref<8x128xf32, #tpu.memory_space<vmem>>, %arg2: memref<128x128xf32, #tpu.memory_space<vmem>>, %arg3: memref<1x128xf32, #tpu.memory_space<vmem>>, %arg4: memref<128x128xf32, #tpu.memory_space<vmem>>, %arg5: memref<1x128xf32, #tpu.memory_space<vmem>>, %arg6: memref<8x128xf32, #tpu.memory_space<vmem>>) attributes {dimension_semantics = [#tpu.dimension_semantics<parallel>], iteration_bounds = array<i64: 1>, scalar_prefetch = 0 : i64, scratch_operands = 0 : i64, tpu.core_type = #tpu.core_type<tc>, window_params = [{transform_indices = @transform_0, window_bounds = array<i64: 8, 128>}, {pipeline_mode = #tpu.pipeline_mode<synchronous>, transform_indices = @transform_1, window_bounds = array<i64: 128, 128>}, {pipeline_mode = #tpu.pipeline_mode<synchronous>, transform_indices = @transform_2, window_bounds = array<i64: 1, 128>}, {pipeline_mode = #tpu.pipeline_mode<synchronous>, transform_indices = @transform_3, window_bounds = array<i64: 128, 128>}, {pipeline_mode = #tpu.pipeline_mode<synchronous>, transform_indices = @transform_4, window_bounds = array<i64: 1, 128>}, {transform_indices = @transform_5, window_bounds = array<i64: 8, 128>}]} {
    %c0 = arith.constant 0 : index
    %c0_0 = arith.constant 0 : index
    %0 = vector.load %arg1[%c0, %c0_0] : memref<8x128xf32, #tpu.memory_space<vmem>>, vector<8x128xf32>
    %c0_1 = arith.constant 0 : index
    %c0_2 = arith.constant 0 : index
    %1 = vector.load %arg2[%c0_1, %c0_2] : memref<128x128xf32, #tpu.memory_space<vmem>>, vector<128x128xf32>
    %cst = arith.constant dense<0.000000e+00> : vector<8x128xf32>
    %2 = tpu.matmul %0, %1, %cst {dimension_numbers = #tpu.dot_dimension_numbers<[1], [0], [0], [1], [0, 0, 1, 1], [], []>} : vector<8x128xf32>, vector<128x128xf32>, vector<8x128xf32> -> vector<8x128xf32>
    %c0_3 = arith.constant 0 : index
    %c0_4 = arith.constant 0 : index
    %3 = vector.load %arg3[%c0_3, %c0_4] : memref<1x128xf32, #tpu.memory_space<vmem>>, vector<1x128xf32>
    %4 = vector.broadcast %3 : vector<1x128xf32> to vector<8x128xf32>
    %5 = arith.addf %2, %4 : vector<8x128xf32>
    %cst_5 = arith.constant 0.000000e+00 : f32
    %6 = vector.broadcast %cst_5 : f32 to vector<8x128xf32>
    %7 = arith.maximumf %5, %6 : vector<8x128xf32>
    %c0_6 = arith.constant 0 : index
    %c0_7 = arith.constant 0 : index
    %8 = vector.load %arg4[%c0_6, %c0_7] : memref<128x128xf32, #tpu.memory_space<vmem>>, vector<128x128xf32>
    %cst_8 = arith.constant dense<0.000000e+00> : vector<8x128xf32>
    %9 = tpu.matmul %7, %8, %cst_8 {dimension_numbers = #tpu.dot_dimension_numbers<[1], [0], [0], [1], [0, 0, 1, 1], [], []>} : vector<8x128xf32>, vector<128x128xf32>, vector<8x128xf32> -> vector<8x128xf32>
    %c0_9 = arith.constant 0 : index
    %c0_10 = arith.constant 0 : index
    %10 = vector.load %arg5[%c0_9, %c0_10] : memref<1x128xf32, #tpu.memory_space<vmem>>, vector<1x128xf32>
    %11 = vector.broadcast %10 : vector<1x128xf32> to vector<8x128xf32>
    %12 = arith.addf %9, %11 : vector<8x128xf32>
    %13 = math.tanh %12 : vector<8x128xf32>
    %c0_11 = arith.constant 0 : index
    %c0_12 = arith.constant 0 : index
    %14 = vector.load %arg6[%c0_11, %c0_12] : memref<8x128xf32, #tpu.memory_space<vmem>>, vector<8x128xf32>
    tpu.vector_store %arg6[%c0_11, %c0_12], %13 {strides = array<i32>} : memref<8x128xf32, #tpu.memory_space<vmem>>, vector<8x128xf32>,
    return
  }
  func.func @transform_0(%arg0: i32) -> (i32, i32) {
    %c0_i32 = arith.constant 0 : i32
    %c0_i32_0 = arith.constant 0 : i32
    return %arg0, %c0_i32 : i32, i32
  }
  func.func @transform_1(%arg0: i32) -> (i32, i32) {
    %c0_i32 = arith.constant 0 : i32
    %c0_i32_0 = arith.constant 0 : i32
    %c0_i32_1 = arith.constant 0 : i32
    return %c0_i32, %c0_i32_0 : i32, i32
  }
  func.func @transform_2(%arg0: i32) -> (i32, i32) {
    %c0_i32 = arith.constant 0 : i32
    %c0_i32_0 = arith.constant 0 : i32
    %c0_i32_1 = arith.constant 0 : i32
    return %c0_i32, %c0_i32_0 : i32, i32
  }
  func.func @transform_3(%arg0: i32) -> (i32, i32) {
    %c0_i32 = arith.constant 0 : i32
    %c0_i32_0 = arith.constant 0 : i32
    %c0_i32_1 = arith.constant 0 : i32
    return %c0_i32, %c0_i32_0 : i32, i32
  }
  func.func @transform_4(%arg0: i32) -> (i32, i32) {
    %c0_i32 = arith.constant 0 : i32
    %c0_i32_0 = arith.constant 0 : i32
    %c0_i32_1 = arith.constant 0 : i32
    return %c0_i32, %c0_i32_0 : i32, i32
  }
  func.func @transform_5(%arg0: i32) -> (i32, i32) {
    %c0_i32 = arith.constant 0 : i32
    %c0_i32_0 = arith.constant 0 : i32
    return %arg0, %c0_i32 : i32, i32
  }
}

</mosaic_0001>

<llo_original>
// kernel: tpu_custom_call.1
$region0: #{tpu_custom_call.1}
  #allocation0 [shape = 'u32[]', space=smem, size = 0x4, offset = 0x4, fixed_abs, tag = 'smem constant byte address 0x4 - core index']
  #allocation1 [shape = 'u32[144,128]{1,0:T(1,128)}', space=vmem, size = 0x12000, scoped, tag = 'internal scratch']
  %s0 = inlined_call_operand.hbm [shape: f32[8,128], index: 0, kind: input, shape index: {}]
  %s1 = inlined_call_operand.hbm [shape: f32[128,128], index: 1, kind: input, shape index: {}]
  %s2 = inlined_call_operand.vmem [shape: f32[1,128], index: 2, kind: input, shape index: {}]
  %s3 = inlined_call_operand.hbm [shape: f32[128,128], index: 3, kind: input, shape index: {}]
  %s4 = inlined_call_operand.vmem [shape: f32[1,128], index: 4, kind: input, shape index: {}]
  %s5 = inlined_call_operand.hbm [shape: f32[8,128], index: 5, kind: output, shape index: {}]
  %s6 = sld [smem:[#allocation0]]
  $region42: #{tpu_custom_call.1} parent=0
    _
  %s8 = ssub.s32 1, %s6
  %s9 = scalar_select 0, %s8, %s6
  $region1: #{tpu_custom_call.1} parent=0
    #allocation2 [shape = 'u8[4096]{0}', space=vmem, size = 0x1000, scoped, tag = 'input window, operand 0, single buffered']
    #allocation3 [shape = 's32[1]{0}', space=sflag, size = 0x4, scoped, tag = 'scoped memory for tpu_custom_call.1']
    #allocation4 [shape = 's32[1]{0}', space=sflag, size = 0x4, scoped, tag = 'scoped memory for tpu_custom_call.1']
    #allocation5 [shape = 'u8[65536]{0}', space=vmem, size = 0x10000, scoped, tag = 'input window, operand 1, single buffered']
    #allocation6 [shape = 's32[1]{0}', space=sflag, size = 0x4, scoped, tag = 'scoped memory for tpu_custom_call.1']
    #allocation7 [shape = 'u8[65536]{0}', space=vmem, size = 0x10000, scoped, tag = 'input window, operand 3, single buffered']
    #allocation8 [shape = 'u8[4096]{0}', space=vmem, size = 0x1000, scoped, tag = 'output window, operand 0, single buffered']
    %10 = vsyncpa [#allocation3], 0
    %11 = vsyncpa [#allocation6], 0
    %12 = vsyncpa [#allocation4], 0
    // Predicated region
    $region2: #{tpu_custom_call.1} parent=1 // pred_check
      _
    $region3: #{tpu_custom_call.1} parent=1 // pred_check_branch
      %14 = sbr.rel (0) target = $region5
    $region4: #{tpu_custom_call.1} parent=1 // pred_region
      %s16 = ssub.s32 128, 128
      %17 = vsyncadd [#allocation3], %s16
      %s19 = sshll.u32 [#allocation2], 4
      %s20 = int_to_ptr.vmem [resolvable:$true] %s19
      %22 = dma.hbm_to_vmem [thread:$0]  %s0, 128, %s20, [#allocation3]
    $region5: #{tpu_custom_call.1} parent=1 // pred_fallthru
      _
    // Predicated region
    $region6: #{tpu_custom_call.1} parent=1 // pred_check
      _
    $region7: #{tpu_custom_call.1} parent=1 // pred_check_branch
      %24 = sbr.rel (0) target = $region9
    $region8: #{tpu_custom_call.1} parent=1 // pred_region
      %s26 = ssub.s32 2048, 2048
      %27 = vsyncadd [#allocation6], %s26
      %s28 = sshll.u32 [#allocation5], 4
      %s29 = int_to_ptr.vmem [resolvable:$true] %s28
      %34 = dma.hbm_to_vmem [thread:$0]  %s1, 2048, %s29, [#allocation6], 128, 128, 8
    $region9: #{tpu_custom_call.1} parent=1 // pred_fallthru
      _
    // Predicated region
    $region10: #{tpu_custom_call.1} parent=1 // pred_check
      _
    $region11: #{tpu_custom_call.1} parent=1 // pred_check_branch
      %36 = sbr.rel (0) target = $region13
    $region12: #{tpu_custom_call.1} parent=1 // pred_region
      _
    $region13: #{tpu_custom_call.1} parent=1 // pred_fallthru
      _
    // Predicated region
    $region14: #{tpu_custom_call.1} parent=1 // pred_check
      _
    $region15: #{tpu_custom_call.1} parent=1 // pred_check_branch
      %38 = sbr.rel (0) target = $region17
    $region16: #{tpu_custom_call.1} parent=1 // pred_region
      %s40 = ssub.s32 2048, 2048
      %41 = vsyncadd [#allocation6], %s40
      %s42 = sshll.u32 [#allocation7], 4
      %s43 = int_to_ptr.vmem [resolvable:$true] %s42
      %48 = dma.hbm_to_vmem [thread:$0]  %s3, 2048, %s43, [#allocation6], 128, 128, 8
    $region17: #{tpu_custom_call.1} parent=1 // pred_fallthru
      _
    // Predicated region
    $region18: #{tpu_custom_call.1} parent=1 // pred_check
      _
    $region19: #{tpu_custom_call.1} parent=1 // pred_check_branch
      %50 = sbr.rel (0) target = $region21
    $region20: #{tpu_custom_call.1} parent=1 // pred_region
      _
    $region21: #{tpu_custom_call.1} parent=1 // pred_fallthru
      _
    // Predicated region
    $region22: #{tpu_custom_call.1} parent=1 // pred_check
      _
    $region23: #{tpu_custom_call.1} parent=1 // pred_check_branch
      %52 = sbr.rel (0) target = $region25
    $region24: #{tpu_custom_call.1} parent=1 // pred_region
      %53 = dma.done [#allocation3], 128
    $region25: #{tpu_custom_call.1} parent=1 // pred_fallthru
      _
    // Predicated region
    $region26: #{tpu_custom_call.1} parent=1 // pred_check
      _
    $region27: #{tpu_custom_call.1} parent=1 // pred_check_branch
      %55 = sbr.rel (0) target = $region29
    $region28: #{tpu_custom_call.1} parent=1 // pred_region
      %56 = dma.done [#allocation6], 2048
    $region29: #{tpu_custom_call.1} parent=1 // pred_fallthru
      _
    // Predicated region
    $region30: #{tpu_custom_call.1} parent=1 // pred_check
      _
    $region31: #{tpu_custom_call.1} parent=1 // pred_check_branch
      %58 = sbr.rel (0) target = $region33
    $region32: #{tpu_custom_call.1} parent=1 // pred_region
      %59 = dma.done [#allocation6], 2048
    $region33: #{tpu_custom_call.1} parent=1 // pred_fallthru
      _
    %v60 = vld [vmem:[#allocation2] sm:$0xff]
    %v61 = vld [vmem:[#allocation5] sm:$0xff]
    %v62 = vld [vmem:[#allocation5 + $0x8] sm:$0xff]
    %v63 = vld [vmem:[#allocation5 + $0x10] sm:$0xff]
    %v64 = vld [vmem:[#allocation5 + $0x18] sm:$0xff]
    %v65 = vld [vmem:[#allocation5 + $0x20] sm:$0xff]
    %v66 = vld [vmem:[#allocation5 + $0x28] sm:$0xff]
    %v67 = vld [vmem:[#allocation5 + $0x30] sm:$0xff]
    %v68 = vld [vmem:[#allocation5 + $0x38] sm:$0xff]
    %v69 = vld [vmem:[#allocation5 + $0x40] sm:$0xff]
    %v70 = vld [vmem:[#allocation5 + $0x48] sm:$0xff]
    %v71 = vld [vmem:[#allocation5 + $0x50] sm:$0xff]
    %v72 = vld [vmem:[#allocation5 + $0x58] sm:$0xff]
    %v73 = vld [vmem:[#allocation5 + $0x60] sm:$0xff]
    %v74 = vld [vmem:[#allocation5 + $0x68] sm:$0xff]
    %v75 = vld [vmem:[#allocation5 + $0x70] sm:$0xff]
    %v76 = vld [vmem:[#allocation5 + $0x78] sm:$0xff]
    %v77 = vld [vmem:[%s2] sm:$0x1]
    %v79 = vlaneseq
    %v80 = vshrl.u32 %v79, 7
    %v81 = vsub.s32 0, %v80
    %v82 = vrot.slane %v77, %v81
    %84 = vmatprep.subr.mxu0 0.0
    %85 = vmatpush1.msra.mxu0 %v76
    %86 = vmatprep.subr.mxu0 0.0
    %87 = vmatpush1.msra.mxu0 %v75
    %88 = vmatprep.subr.mxu0 0.0
    %89 = vmatpush1.msra.mxu0 %v74
    %90 = vmatprep.subr.mxu0 0.0
    %91 = vmatpush1.msra.mxu0 %v73
    %92 = vmatprep.subr.mxu0 0.0
    %93 = vmatpush1.msra.mxu0 %v72
    %94 = vmatprep.subr.mxu0 0.0
    %95 = vmatpush1.msra.mxu0 %v71
    %96 = vmatprep.subr.mxu0 0.0
    %97 = vmatpush1.msra.mxu0 %v70
    %98 = vmatprep.subr.mxu0 0.0
    %99 = vmatpush1.msra.mxu0 %v69
    %100 = vmatprep.subr.mxu0 0.0
    %101 = vmatpush1.msra.mxu0 %v68
    %102 = vmatprep.subr.mxu0 0.0
    %103 = vmatpush1.msra.mxu0 %v67
    %104 = vmatprep.subr.mxu0 0.0
    %105 = vmatpush1.msra.mxu0 %v66
    %106 = vmatprep.subr.mxu0 0.0
    %107 = vmatpush1.msra.mxu0 %v65
    %108 = vmatprep.subr.mxu0 0.0
    %109 = vmatpush1.msra.mxu0 %v64
    %110 = vmatprep.subr.mxu0 0.0
    %111 = vmatpush1.msra.mxu0 %v63
    %112 = vmatprep.subr.mxu0 0.0
    %113 = vmatpush1.msra.mxu0 %v62
    %114 = vmatprep.subr.mxu0 0.0
    %115 = vmatpush1.msra.mxu0 %v61
    %116 = vmatprep.subr.mxu0 0.0
    %117 = vmatpush2.msra.mxu0 0.0
    %118 = vmatprep.subr.mxu0 0.0
    %119 = vmatpush2.msra.mxu0 0.0
    %120 = vmatprep.subr.mxu0 0.0
    %121 = vmatpush2.msra.mxu0 0.0
    %122 = vmatprep.subr.mxu0 0.0
    %123 = vmatpush2.msra.mxu0 0.0
    %124 = vmatprep.subr.mxu0 0.0
    %125 = vmatpush2.msra.mxu0 0.0
    %126 = vmatprep.subr.mxu0 0.0
    %127 = vmatpush2.msra.mxu0 0.0
    %128 = vmatprep.subr.mxu0 0.0
    %129 = vmatpush2.msra.mxu0 0.0
    %130 = vmatprep.subr.mxu0 0.0
    %131 = vmatpush2.msra.mxu0 0.0
    %132 = vmatprep.subr.mxu0 0.0
    %133 = vmatpush2.msra.mxu0 0.0
    %134 = vmatprep.subr.mxu0 0.0
    %135 = vmatpush2.msra.mxu0 0.0
    %136 = vmatprep.subr.mxu0 0.0
    %137 = vmatpush2.msra.mxu0 0.0
    %138 = vmatprep.subr.mxu0 0.0
    %139 = vmatpush2.msra.mxu0 0.0
    %140 = vmatprep.subr.mxu0 0.0
    %141 = vmatpush2.msra.mxu0 0.0
    %142 = vmatprep.subr.mxu0 0.0
    %143 = vmatpush2.msra.mxu0 0.0
    %144 = vmatprep.subr.mxu0 0.0
    %145 = vmatpush2.msra.mxu0 0.0
    %146 = vmatprep.subr.mxu0 0.0
    %147 = vmatpush2.msra.mxu0 0.0
    %148 = vmatprep.mubr.f32.mxu0 0.0
    %149 = vmatmul.mubr.f32.gmra.mxu0 %v60
    %v150 = vpop.f32.mrf.mxu0
    %v151 = vadd.f32 %v82, %v150
    %v152 = vpop.f32.mrf.mxu0
    %153 = vdwg.mxu0
    %v154 = vmax.f32 %v151, 0.0
    %v155 = vld [vmem:[#allocation7] sm:$0xff]
    %v156 = vld [vmem:[#allocation7 + $0x8] sm:$0xff]
    %v157 = vld [vmem:[#allocation7 + $0x10] sm:$0xff]
    %v158 = vld [vmem:[#allocation7 + $0x18] sm:$0xff]
    %v159 = vld [vmem:[#allocation7 + $0x20] sm:$0xff]
    %v160 = vld [vmem:[#allocation7 + $0x28] sm:$0xff]
    %v161 = vld [vmem:[#allocation7 + $0x30] sm:$0xff]
    %v162 = vld [vmem:[#allocation7 + $0x38] sm:$0xff]
    %v163 = vld [vmem:[#allocation7 + $0x40] sm:$0xff]
    %v164 = vld [vmem:[#allocation7 + $0x48] sm:$0xff]
    %v165 = vld [vmem:[#allocation7 + $0x50] sm:$0xff]
    %v166 = vld [vmem:[#allocation7 + $0x58] sm:$0xff]
    %v167 = vld [vmem:[#allocation7 + $0x60] sm:$0xff]
    %v168 = vld [vmem:[#allocation7 + $0x68] sm:$0xff]
    %v169 = vld [vmem:[#allocation7 + $0x70] sm:$0xff]
    %v170 = vld [vmem:[#allocation7 + $0x78] sm:$0xff]
    %v171 = vld [vmem:[%s4] sm:$0x1]
    %v173 = vlaneseq
    %v174 = vshrl.u32 %v173, 7
    %v175 = vsub.s32 0, %v174
    %v176 = vrot.slane %v171, %v175
    %178 = vmatprep.subr.mxu0 0.0
    %179 = vmatpush1.msra.mxu0 %v170
    %180 = vmatprep.subr.mxu0 0.0
    %181 = vmatpush1.msra.mxu0 %v169
    %182 = vmatprep.subr.mxu0 0.0
    %183 = vmatpush1.msra.mxu0 %v168
    %184 = vmatprep.subr.mxu0 0.0
    %185 = vmatpush1.msra.mxu0 %v167
    %186 = vmatprep.subr.mxu0 0.0
    %187 = vmatpush1.msra.mxu0 %v166
    %188 = vmatprep.subr.mxu0 0.0
    %189 = vmatpush1.msra.mxu0 %v165
    %190 = vmatprep.subr.mxu0 0.0
    %191 = vmatpush1.msra.mxu0 %v164
    %192 = vmatprep.subr.mxu0 0.0
    %193 = vmatpush1.msra.mxu0 %v163
    %194 = vmatprep.subr.mxu0 0.0
    %195 = vmatpush1.msra.mxu0 %v162
    %196 = vmatprep.subr.mxu0 0.0
    %197 = vmatpush1.msra.mxu0 %v161
    %198 = vmatprep.subr.mxu0 0.0
    %199 = vmatpush1.msra.mxu0 %v160
    %200 = vmatprep.subr.mxu0 0.0
    %201 = vmatpush1.msra.mxu0 %v159
    %202 = vmatprep.subr.mxu0 0.0
    %203 = vmatpush1.msra.mxu0 %v158
    %204 = vmatprep.subr.mxu0 0.0
    %205 = vmatpush1.msra.mxu0 %v157
    %206 = vmatprep.subr.mxu0 0.0
    %207 = vmatpush1.msra.mxu0 %v156
    %208 = vmatprep.subr.mxu0 0.0
    %209 = vmatpush1.msra.mxu0 %v155
    %210 = vmatprep.subr.mxu0 0.0
    %211 = vmatpush2.msra.mxu0 0.0
    %212 = vmatprep.subr.mxu0 0.0
    %213 = vmatpush2.msra.mxu0 0.0
    %214 = vmatprep.subr.mxu0 0.0
    %215 = vmatpush2.msra.mxu0 0.0
    %216 = vmatprep.subr.mxu0 0.0
    %217 = vmatpush2.msra.mxu0 0.0
    %218 = vmatprep.subr.mxu0 0.0
    %219 = vmatpush2.msra.mxu0 0.0
    %220 = vmatprep.subr.mxu0 0.0
    %221 = vmatpush2.msra.mxu0 0.0
    %222 = vmatprep.subr.mxu0 0.0
    %223 = vmatpush2.msra.mxu0 0.0
    %224 = vmatprep.subr.mxu0 0.0
    %225 = vmatpush2.msra.mxu0 0.0
    %226 = vmatprep.subr.mxu0 0.0
    %227 = vmatpush2.msra.mxu0 0.0
    %228 = vmatprep.subr.mxu0 0.0
    %229 = vmatpush2.msra.mxu0 0.0
    %230 = vmatprep.subr.mxu0 0.0
    %231 = vmatpush2.msra.mxu0 0.0
    %232 = vmatprep.subr.mxu0 0.0
    %233 = vmatpush2.msra.mxu0 0.0
    %234 = vmatprep.subr.mxu0 0.0
    %235 = vmatpush2.msra.mxu0 0.0
    %236 = vmatprep.subr.mxu0 0.0
    %237 = vmatpush2.msra.mxu0 0.0
    %238 = vmatprep.subr.mxu0 0.0
    %239 = vmatpush2.msra.mxu0 0.0
    %240 = vmatprep.subr.mxu0 0.0
    %241 = vmatpush2.msra.mxu0 0.0
    %242 = vmatprep.mubr.f32.mxu0 0.0
    %243 = vmatmul.mubr.f32.gmra.mxu0 %v154
    %v244 = vpop.f32.mrf.mxu0
    %v245 = vadd.f32 %v176, %v244
    %v246 = vpop.f32.mrf.mxu0
    %247 = vdwg.mxu0
    %v248 = vtanh.pop %v245
    %249 = vst [vmem:[#allocation8] sm:$0xff] %v248
    // Predicated region
    $region34: #{tpu_custom_call.1} parent=1 // pred_check
      _
    $region35: #{tpu_custom_call.1} parent=1 // pred_check_branch
      %251 = sbr.rel (0) target = $region37
    $region36: #{tpu_custom_call.1} parent=1 // pred_region
      %s253 = ssub.s32 128, 128
      %254 = vsyncadd [#allocation4], %s253
      %s256 = sshll.u32 [#allocation8], 4
      %s257 = int_to_ptr.vmem [resolvable:$true] %s256
      %259 = dma.vmem_to_hbm [thread:$0]  %s257, 128, %s5, [#allocation4]
    $region37: #{tpu_custom_call.1} parent=1 // pred_fallthru
      _
    // Predicated region
    $region38: #{tpu_custom_call.1} parent=1 // pred_check
      _
    $region39: #{tpu_custom_call.1} parent=1 // pred_check_branch
      %261 = sbr.rel (0) target = $region41
    $region40: #{tpu_custom_call.1} parent=1 // pred_region
      %262 = dma.done [#allocation4], 128
    $region41: #{tpu_custom_call.1} parent=1 // pred_fallthru
      _
    %263 = vsyncpa [#allocation3], 1
    %264 = vsyncpa [#allocation6], 1
    %265 = vsyncpa [#allocation4], 1

</llo_original>
